<compile_context>
chip_gen: v5e
topology: v5e:2x2
jax: 0.10.0
libtpu: 0.0.40
codegen_flags: <defaults>
</compile_context>

<pallas_src>
import math

import jax
import jax.numpy as jnp
from jax.experimental import pallas as pl
from jax.experimental.pallas import tpu as pltpu

HID_SIZE = 64


def _round_up(n, m):
    return ((n + m - 1) // m) * m


def _critic_kernel(x_ref, w1t_ref, b1_ref, w2t_ref, b2_ref, w3_ref, b3_ref, out_ref):
    """Whole 3-layer MLP fused, batch on the lane/N axis.

    x_ref  : (tile_b, obs)  f32  (batch tile, untransposed in HBM/VMEM)
    w1t    : (HID, obs)     f32  (W1 transposed)
    b1     : (HID, 1)       f32  (column bias, broadcast over lanes)
    w2t    : (HID, HID)     f32  (W2 transposed)
    b2     : (HID, 1)       f32
    w3     : (HID, 1)       f32  (final layer as a column, used on VPU/XLU)
    b3     : (1, 1)         f32, SMEM scalar
    out    : (1, tile_b)    f32, lane-dense row
    """
    # Layer 1: NT matmul — contract the obs axes of w1t (dim 1) and x (dim 1).
    # Result is (HID, tile_b): batch on N, weight as the tiny LHS.
    h1 = jax.lax.dot_general(
        w1t_ref[...], x_ref[...],
        dimension_numbers=(((1,), (1,)), ((), ())),
        preferred_element_type=jnp.float32)
    h1 = jnp.maximum(h1 + b1_ref[...], 0.0)

    # Layer 2: standard (HID, HID) @ (HID, tile_b) MXU matmul.
    h2 = jnp.dot(w2t_ref[...], h1, preferred_element_type=jnp.float32)
    h2 = jnp.maximum(h2 + b2_ref[...], 0.0)

    # Final N=1 layer: VPU broadcast-multiply + sublane (axis 0) reduce.
    # Produces the (1, tile_b) output row lane-dense by construction.
    y = jnp.sum(h2 * w3_ref[...], axis=0, keepdims=True) + b3_ref[0, 0]
    out_ref[...] = y.astype(out_ref.dtype)


def model_critic_forward(x, params, *, block_b=2048):
    """x: [B, obs_size] float32 -> [B, 1] float32."""
    w1, b1, w2, b2, w3, b3 = params
    B, obs = x.shape
    hid = w1.shape[1]

    # Transposed-weight / column-bias views for the batch-on-lanes kernel.
    # These are tiny one-off XLA ops on the weights, not on x.
    w1t = w1.T                        # (hid, obs)
    b1c = b1.reshape(hid, 1)          # (hid, 1)
    w2t = w2.T                        # (hid, hid)
    b2c = b2.reshape(hid, 1)          # (hid, 1)
    w3c = w3.reshape(hid, 1)          # (hid, 1)
    b3s = b3.reshape(1, 1)            # (1, 1) -> SMEM scalar

    # Tile selection:
    #   * single tile for small batches (no grid overhead),
    #   * otherwise balanced 128-aligned tiles (pad bounded to <128 rows/tile),
    #   * force >=2 grid steps once B >= 512 so v7x can split across its 2 TCs.
    num_tiles = pl.cdiv(B, block_b)
    if B >= 512:
        num_tiles = max(num_tiles, 2)
    if num_tiles == 1:
        tile_b = max(8, _round_up(B, 8))
    else:
        tile_b = _round_up(pl.cdiv(B, num_tiles), 128)
    B_pad = num_tiles * tile_b
    if B_pad != B:
        x = jnp.pad(x, ((0, B_pad - B), (0, 0)))

    in_specs = [
        pl.BlockSpec((tile_b, obs), lambda i: (i, 0)),         # x (batch-tiled)
        pl.BlockSpec((hid, obs), lambda i: (0, 0)),            # w1^T (resident)
        pl.BlockSpec((hid, 1), lambda i: (0, 0)),              # b1 column
        pl.BlockSpec((hid, hid), lambda i: (0, 0)),            # w2^T
        pl.BlockSpec((hid, 1), lambda i: (0, 0)),              # b2 column
        pl.BlockSpec((hid, 1), lambda i: (0, 0)),              # w3 column
        pl.BlockSpec((1, 1), lambda i: (0, 0),                 # b3 scalar in SMEM
                     memory_space=pltpu.MemorySpace.SMEM),
    ]
    # Lane-dense output: (1, B_pad); each tile writes a full (1, tile_b) row slab.
    out_specs = pl.BlockSpec((1, tile_b), lambda i: (0, i))

    flops = 2 * B_pad * (obs * hid + hid * hid + hid)
    bytes_accessed = (
        4 * B_pad * (obs + 1)                         # x in, y out
        + 4 * (obs * hid + hid * hid + 3 * hid + 1)   # weights + biases (approx)
    )

    out_row = pl.pallas_call(
        _critic_kernel,
        out_shape=jax.ShapeDtypeStruct((1, B_pad), jnp.float32),
        grid=(num_tiles,),
        in_specs=in_specs,
        out_specs=out_specs,
        compiler_params=pltpu.CompilerParams(
            dimension_semantics=("parallel",)
        ),
        cost_estimate=pl.CostEstimate(
            flops=int(flops), transcendentals=0, bytes_accessed=int(bytes_accessed)
        ),
    )(x, w1t, b1c, w2t, b2c, w3c, b3s)

    return out_row.reshape(B_pad)[:B].reshape(B, 1)


def init_params(key, obs_size):
    """Deterministic init mimicking torch.nn.Linear defaults: U(-1/sqrt(fan_in), 1/sqrt(fan_in))."""
    def linear(key, fan_in, fan_out):
        kw, kb = jax.random.split(key)
        bound = 1.0 / math.sqrt(fan_in)
        w = jax.random.uniform(kw, (fan_in, fan_out), jnp.float32, -bound, bound)
        b = jax.random.uniform(kb, (1, fan_out), jnp.float32, -bound, bound)
        return w, b

    k1, k2, k3 = jax.random.split(key, 3)
    w1, b1 = linear(k1, obs_size, HID_SIZE)
    w2, b2 = linear(k2, HID_SIZE, HID_SIZE)
    w3, b3 = linear(k3, HID_SIZE, 1)
    return (w1, b1, w2, b2, w3, b3)


def reference_forward(x, params):
    """Plain-JAX reference matching the PyTorch forward."""
    w1, b1, w2, b2, w3, b3 = params
    h = jnp.maximum(x @ w1 + b1, 0.0)
    h = jnp.maximum(h @ w2 + b2, 0.0)
    return h @ w3 + b3


if __name__ == "__main__":
    # HalfCheetah(PyBullet) observation size is 26.
    OBS = 26
    key = jax.random.PRNGKey(0)
    kx, kp = jax.random.split(key)
    params = init_params(kp, OBS)

    # Small batch: single-tile path (no grid overhead).
    B = 16
    x = jax.random.normal(kx, (B, OBS), dtype=jnp.float32)
    out = jax.block_until_ready(model_critic_forward(x, params))
    ref = reference_forward(x, params)
    assert out.shape == (B, 1)
    assert jnp.allclose(out, ref, atol=1e-4, rtol=1e-4), "mismatch vs. reference (small batch)"

    # Non-aligned batch forced through the multi-tile grid + padding path.
    B2 = 300
    x2 = jax.random.normal(jax.random.PRNGKey(1), (B2, OBS), dtype=jnp.float32)
    out2 = jax.block_until_ready(model_critic_forward(x2, params, block_b=128))
    ref2 = reference_forward(x2, params)
    assert out2.shape == (B2, 1)
    assert jnp.allclose(out2, ref2, atol=1e-4, rtol=1e-4), "mismatch vs. reference (tiled batch)"

    # Mid batch: automatic >=2 balanced tiles (v7x megacore-split path).
    B3 = 640
    x3 = jax.random.normal(jax.random.PRNGKey(2), (B3, OBS), dtype=jnp.float32)
    out3 = jax.block_until_ready(model_critic_forward(x3, params))
    ref3 = reference_forward(x3, params)
    assert out3.shape == (B3, 1)
    assert jnp.allclose(out3, ref3, atol=1e-4, rtol=1e-4), "mismatch vs. reference (mid batch)"

    print("KERNEL_OK")
</pallas_src>

<mosaic_0001>
module attributes {stable_mosaic.version = 11 : i64} {
  func.func @_critic_kernel(%arg0: i32, %arg1: memref<16x26xf32, #tpu.memory_space<vmem>>, %arg2: memref<64x26xf32, #tpu.memory_space<vmem>>, %arg3: memref<64x1xf32, #tpu.memory_space<vmem>>, %arg4: memref<64x64xf32, #tpu.memory_space<vmem>>, %arg5: memref<64x1xf32, #tpu.memory_space<vmem>>, %arg6: memref<64x1xf32, #tpu.memory_space<vmem>>, %arg7: memref<1x1xf32, #tpu.memory_space<smem>>, %arg8: memref<1x16xf32, #tpu.memory_space<vmem>>) attributes {dimension_semantics = [#tpu.dimension_semantics<parallel>], iteration_bounds = array<i64: 1>, scalar_prefetch = 0 : i64, scratch_operands = 0 : i64, tpu.core_type = #tpu.core_type<tc>, window_params = [{transform_indices = @transform_0, window_bounds = array<i64: 16, 26>}, {pipeline_mode = #tpu.pipeline_mode<synchronous>, transform_indices = @transform_1, window_bounds = array<i64: 64, 26>}, {pipeline_mode = #tpu.pipeline_mode<synchronous>, transform_indices = @transform_2, window_bounds = array<i64: 64, 1>}, {pipeline_mode = #tpu.pipeline_mode<synchronous>, transform_indices = @transform_3, window_bounds = array<i64: 64, 64>}, {pipeline_mode = #tpu.pipeline_mode<synchronous>, transform_indices = @transform_4, window_bounds = array<i64: 64, 1>}, {pipeline_mode = #tpu.pipeline_mode<synchronous>, transform_indices = @transform_5, window_bounds = array<i64: 64, 1>}, {transform_indices = @transform_6, window_bounds = array<i64: 1, 1>}, {transform_indices = @transform_7, window_bounds = array<i64: 1, 16>}]} {
    %c0 = arith.constant 0 : index
    %c0_0 = arith.constant 0 : index
    %0 = vector.load %arg2[%c0, %c0_0] : memref<64x26xf32, #tpu.memory_space<vmem>>, vector<64x26xf32>
    %c0_1 = arith.constant 0 : index
    %c0_2 = arith.constant 0 : index
    %1 = vector.load %arg1[%c0_1, %c0_2] : memref<16x26xf32, #tpu.memory_space<vmem>>, vector<16x26xf32>
    %cst = arith.constant dense<0.000000e+00> : vector<64x16xf32>
    %2 = tpu.matmul %0, %1, %cst {dimension_numbers = #tpu.dot_dimension_numbers<[1], [1], [0], [0], [0, 0, 1, 0], [], []>} : vector<64x26xf32>, vector<16x26xf32>, vector<64x16xf32> -> vector<64x16xf32>
    %c0_3 = arith.constant 0 : index
    %c0_4 = arith.constant 0 : index
    %3 = vector.load %arg3[%c0_3, %c0_4] : memref<64x1xf32, #tpu.memory_space<vmem>>, vector<64x1xf32>
    %4 = vector.broadcast %3 : vector<64x1xf32> to vector<64x16xf32>
    %5 = arith.addf %2, %4 : vector<64x16xf32>
    %cst_5 = arith.constant 0.000000e+00 : f32
    %6 = vector.broadcast %cst_5 : f32 to vector<64x16xf32>
    %7 = arith.maximumf %5, %6 : vector<64x16xf32>
    %c0_6 = arith.constant 0 : index
    %c0_7 = arith.constant 0 : index
    %8 = vector.load %arg4[%c0_6, %c0_7] : memref<64x64xf32, #tpu.memory_space<vmem>>, vector<64x64xf32>
    %cst_8 = arith.constant dense<0.000000e+00> : vector<64x16xf32>
    %9 = tpu.matmul %8, %7, %cst_8 {dimension_numbers = #tpu.dot_dimension_numbers<[1], [0], [0], [1], [0, 0, 1, 1], [], []>} : vector<64x64xf32>, vector<64x16xf32>, vector<64x16xf32> -> vector<64x16xf32>
    %c0_9 = arith.constant 0 : index
    %c0_10 = arith.constant 0 : index
    %10 = vector.load %arg5[%c0_9, %c0_10] : memref<64x1xf32, #tpu.memory_space<vmem>>, vector<64x1xf32>
    %11 = vector.broadcast %10 : vector<64x1xf32> to vector<64x16xf32>
    %12 = arith.addf %9, %11 : vector<64x16xf32>
    %cst_11 = arith.constant 0.000000e+00 : f32
    %13 = vector.broadcast %cst_11 : f32 to vector<64x16xf32>
    %14 = arith.maximumf %12, %13 : vector<64x16xf32>
    %c0_12 = arith.constant 0 : index
    %c0_13 = arith.constant 0 : index
    %15 = vector.load %arg6[%c0_12, %c0_13] : memref<64x1xf32, #tpu.memory_space<vmem>>, vector<64x1xf32>
    %16 = vector.broadcast %15 : vector<64x1xf32> to vector<64x16xf32>
    %17 = arith.mulf %14, %16 : vector<64x16xf32>
    %cst_14 = arith.constant dense<0.000000e+00> : vector<16xf32>
    %18 = vector.multi_reduction <add>, %17, %cst_14 [0] : vector<64x16xf32> to vector<16xf32>
    %19 = vector.shape_cast %18 : vector<16xf32> to vector<1x16xf32>
    %c0_15 = arith.constant 0 : index
    %c0_16 = arith.constant 0 : index
    %20 = memref.load %arg7[%c0_15, %c0_16] : memref<1x1xf32, #tpu.memory_space<smem>>
    %21 = vector.broadcast %20 : f32 to vector<1x16xf32>
    %22 = arith.addf %19, %21 : vector<1x16xf32>
    %c0_17 = arith.constant 0 : index
    %c0_18 = arith.constant 0 : index
    %23 = vector.load %arg8[%c0_17, %c0_18] : memref<1x16xf32, #tpu.memory_space<vmem>>, vector<1x16xf32>
    tpu.vector_store %arg8[%c0_17, %c0_18], %22 {strides = array<i32>} : memref<1x16xf32, #tpu.memory_space<vmem>>, vector<1x16xf32>,
    return
  }
  func.func @transform_0(%arg0: i32) -> (i32, i32) {
    %c0_i32 = arith.constant 0 : i32
    %c0_i32_0 = arith.constant 0 : i32
    return %arg0, %c0_i32 : i32, i32
  }
  func.func @transform_1(%arg0: i32) -> (i32, i32) {
    %c0_i32 = arith.constant 0 : i32
    %c0_i32_0 = arith.constant 0 : i32
    %c0_i32_1 = arith.constant 0 : i32
    return %c0_i32, %c0_i32_0 : i32, i32
  }
  func.func @transform_2(%arg0: i32) -> (i32, i32) {
    %c0_i32 = arith.constant 0 : i32
    %c0_i32_0 = arith.constant 0 : i32
    %c0_i32_1 = arith.constant 0 : i32
    return %c0_i32, %c0_i32_0 : i32, i32
  }
  func.func @transform_3(%arg0: i32) -> (i32, i32) {
    %c0_i32 = arith.constant 0 : i32
    %c0_i32_0 = arith.constant 0 : i32
    %c0_i32_1 = arith.constant 0 : i32
    return %c0_i32, %c0_i32_0 : i32, i32
  }
  func.func @transform_4(%arg0: i32) -> (i32, i32) {
    %c0_i32 = arith.constant 0 : i32
    %c0_i32_0 = arith.constant 0 : i32
    %c0_i32_1 = arith.constant 0 : i32
    return %c0_i32, %c0_i32_0 : i32, i32
  }
  func.func @transform_5(%arg0: i32) -> (i32, i32) {
    %c0_i32 = arith.constant 0 : i32
    %c0_i32_0 = arith.constant 0 : i32
    %c0_i32_1 = arith.constant 0 : i32
    return %c0_i32, %c0_i32_0 : i32, i32
  }
  func.func @transform_6(%arg0: i32) -> (i32, i32) {
    %c0_i32 = arith.constant 0 : i32
    %c0_i32_0 = arith.constant 0 : i32
    %c0_i32_1 = arith.constant 0 : i32
    return %c0_i32, %c0_i32_0 : i32, i32
  }
  func.func @transform_7(%arg0: i32) -> (i32, i32) {
    %c0_i32 = arith.constant 0 : i32
    %c0_i32_0 = arith.constant 0 : i32
    return %c0_i32, %arg0 : i32, i32
  }
}

</mosaic_0001>

<llo_original>
// kernel: tpu_custom_call.1
$region0: #{tpu_custom_call.1}
  #allocation0 [shape = 'u32[]', space=smem, size = 0x4, offset = 0x4, fixed_abs, tag = 'smem constant byte address 0x4 - core index']
  #allocation1 [shape = 'u32[72,128]{1,0:T(1,128)}', space=vmem, size = 0x9000, scoped, tag = 'internal scratch']
  #allocation2 [shape = 'f32[1,1]{1,0:T(1,128)S(6)}', space=smem, size = 0x200, scoped, tag = 'scoped memory for tpu_custom_call.1']
  %s0 = inlined_call_operand.vmem [shape: f32[16,26], index: 0, kind: input, shape index: {}]
  %s1 = inlined_call_operand.vmem [shape: f32[64,26], index: 1, kind: input, shape index: {}]
  %s2 = inlined_call_operand.vmem [shape: f32[64,1], index: 2, kind: input, shape index: {}]
  %s3 = inlined_call_operand.vmem [shape: f32[64,64], index: 3, kind: input, shape index: {}]
  %s4 = inlined_call_operand.vmem [shape: f32[64,1], index: 4, kind: input, shape index: {}]
  %s5 = inlined_call_operand.vmem [shape: f32[64,1], index: 5, kind: input, shape index: {}]
  %s6 = inlined_call_operand.<no memory space> [shape: f32[1,1], index: 6, kind: input, shape index: {}]
  %s7 = inlined_call_operand.hbm [shape: f32[1,16], index: 7, kind: output, shape index: {}]
  %s8 = sld [smem:[#allocation0]]
  $region38: #{tpu_custom_call.1} parent=0
    _
  %s10 = ssub.s32 1, %s8
  %s11 = scalar_select 0, %s10, %s8
  %12 = sst [smem:[#allocation2]] %s6
  $region1: #{tpu_custom_call.1} parent=0
    #allocation3 [shape = 'u8[512]{0}', space=vmem, size = 0x400, scoped, tag = 'output window, operand 0, single buffered']
    #allocation4 [shape = 's32[1]{0}', space=sflag, size = 0x4, scoped, tag = 'scoped memory for tpu_custom_call.1']
    %13 = vsyncpa [#allocation4], 0
    // Predicated region
    $region2: #{tpu_custom_call.1} parent=1 // pred_check
      _
    $region3: #{tpu_custom_call.1} parent=1 // pred_check_branch
      %15 = sbr.rel (0) target = $region5
    $region4: #{tpu_custom_call.1} parent=1 // pred_region
      _
    $region5: #{tpu_custom_call.1} parent=1 // pred_fallthru
      _
    // Predicated region
    $region6: #{tpu_custom_call.1} parent=1 // pred_check
      _
    $region7: #{tpu_custom_call.1} parent=1 // pred_check_branch
      %17 = sbr.rel (0) target = $region9
    $region8: #{tpu_custom_call.1} parent=1 // pred_region
      _
    $region9: #{tpu_custom_call.1} parent=1 // pred_fallthru
      _
    // Predicated region
    $region10: #{tpu_custom_call.1} parent=1 // pred_check
      _
    $region11: #{tpu_custom_call.1} parent=1 // pred_check_branch
      %19 = sbr.rel (0) target = $region13
    $region12: #{tpu_custom_call.1} parent=1 // pred_region
      _
    $region13: #{tpu_custom_call.1} parent=1 // pred_fallthru
      _
    // Predicated region
    $region14: #{tpu_custom_call.1} parent=1 // pred_check
      _
    $region15: #{tpu_custom_call.1} parent=1 // pred_check_branch
      %21 = sbr.rel (0) target = $region17
    $region16: #{tpu_custom_call.1} parent=1 // pred_region
      _
    $region17: #{tpu_custom_call.1} parent=1 // pred_fallthru
      _
    // Predicated region
    $region18: #{tpu_custom_call.1} parent=1 // pred_check
      _
    $region19: #{tpu_custom_call.1} parent=1 // pred_check_branch
      %23 = sbr.rel (0) target = $region21
    $region20: #{tpu_custom_call.1} parent=1 // pred_region
      _
    $region21: #{tpu_custom_call.1} parent=1 // pred_fallthru
      _
    // Predicated region
    $region22: #{tpu_custom_call.1} parent=1 // pred_check
      _
    $region23: #{tpu_custom_call.1} parent=1 // pred_check_branch
      %25 = sbr.rel (0) target = $region25
    $region24: #{tpu_custom_call.1} parent=1 // pred_region
      _
    $region25: #{tpu_custom_call.1} parent=1 // pred_fallthru
      _
    // Predicated region
    $region26: #{tpu_custom_call.1} parent=1 // pred_check
      _
    $region27: #{tpu_custom_call.1} parent=1 // pred_check_branch
      %27 = sbr.rel (0) target = $region29
    $region28: #{tpu_custom_call.1} parent=1 // pred_region
      _
    $region29: #{tpu_custom_call.1} parent=1 // pred_fallthru
      _
    %v28 = vld [vmem:[%s1] sm:$0xff]
    %v29 = vld [vmem:[%s1 + $0x8] sm:$0xff]
    %v30 = vld [vmem:[%s1 + $0x10] sm:$0xff]
    %v31 = vld [vmem:[%s1 + $0x18] sm:$0xff]
    %v32 = vld [vmem:[%s1 + $0x20] sm:$0xff]
    %v33 = vld [vmem:[%s1 + $0x28] sm:$0xff]
    %v34 = vld [vmem:[%s1 + $0x30] sm:$0xff]
    %v35 = vld [vmem:[%s1 + $0x38] sm:$0xff]
    %v36 = vld [vmem:[%s0] sm:$0xff]
    %v37 = vld [vmem:[%s0 + $0x8] sm:$0xff]
    %v38 = vld [vmem:[%s2] sm:$0xff]
    %v39 = vld [vmem:[%s2 + $0x8] sm:$0xff]
    %v40 = vld [vmem:[%s2 + $0x10] sm:$0xff]
    %v41 = vld [vmem:[%s2 + $0x18] sm:$0xff]
    %v42 = vld [vmem:[%s2 + $0x20] sm:$0xff]
    %v43 = vld [vmem:[%s2 + $0x28] sm:$0xff]
    %v44 = vld [vmem:[%s2 + $0x30] sm:$0xff]
    %v45 = vld [vmem:[%s2 + $0x38] sm:$0xff]
    %47 = vset.pattern.permute.xlu0 0
    %48 = vperm.xlu0 %47, %v38
    %v49 = vpop.permute.xlu0 %48
    %52 = vset.pattern.permute.xlu0 0
    %53 = vperm.xlu0 %52, %v39
    %v54 = vpop.permute.xlu0 %53
    %57 = vset.pattern.permute.xlu0 0
    %58 = vperm.xlu0 %57, %v40
    %v59 = vpop.permute.xlu0 %58
    %62 = vset.pattern.permute.xlu0 0
    %63 = vperm.xlu0 %62, %v41
    %v64 = vpop.permute.xlu0 %63
    %67 = vset.pattern.permute.xlu0 0
    %68 = vperm.xlu0 %67, %v42
    %v69 = vpop.permute.xlu0 %68
    %72 = vset.pattern.permute.xlu0 0
    %73 = vperm.xlu0 %72, %v43
    %v74 = vpop.permute.xlu0 %73
    %77 = vset.pattern.permute.xlu0 0
    %78 = vperm.xlu0 %77, %v44
    %v79 = vpop.permute.xlu0 %78
    %82 = vset.pattern.permute.xlu0 0
    %83 = vperm.xlu0 %82, %v45
    %v84 = vpop.permute.xlu0 %83
    %vm86 = vcmask 211968
    %v88 = vsel %vm86, %v28, 0
    %v91 = vsel %vm86, %v29, 0
    %v94 = vsel %vm86, %v30, 0
    %v97 = vsel %vm86, %v31, 0
    %v100 = vsel %vm86, %v32, 0
    %v103 = vsel %vm86, %v33, 0
    %v106 = vsel %vm86, %v34, 0
    %v109 = vsel %vm86, %v35, 0
    %v112 = vsel %vm86, %v36, 0
    %v115 = vsel %vm86, %v37, 0
    %117 = vmatpush.xpose.msra.mxu0 0.0
    %118 = vmatpush.xpose.msra.mxu0 0.0
    %119 = vmatpush.xpose.msra.mxu0 0.0
    %120 = vmatpush.xpose.msra.mxu0 0.0
    %121 = vmatpush.xpose.msra.mxu0 0.0
    %122 = vmatpush.xpose.msra.mxu0 0.0
    %123 = vmatpush.xpose.msra.mxu0 0.0
    %124 = vmatpush.xpose.msra.mxu0 0.0
    %125 = vmatpush.xpose.msra.mxu0 0.0
    %126 = vmatpush.xpose.msra.mxu0 0.0
    %127 = vmatpush.xpose.msra.mxu0 0.0
    %128 = vmatpush.xpose.msra.mxu0 0.0
    %129 = vmatpush.xpose.msra.mxu0 0.0
    %130 = vmatpush.xpose.msra.mxu0 0.0
    %131 = vmatpush.xpose.msra.mxu0 %v115
    %132 = vmatpush.xpose.msra.mxu0 %v112
    %133 = vmatmul.f32.gmra.mxu0 %v88
    %v134 = vpop.f32.mrf.mxu0
    %v135 = vadd.f32 %v49, %v134
    %136 = vmatmul.f32.gmra.mxu0 %v91
    %v137 = vpop.f32.mrf.mxu0
    %v138 = vadd.f32 %v54, %v137
    %139 = vmatmul.f32.gmra.mxu0 %v94
    %v140 = vpop.f32.mrf.mxu0
    %v141 = vadd.f32 %v59, %v140
    %142 = vmatmul.f32.gmra.mxu0 %v97
    %v143 = vpop.f32.mrf.mxu0
    %v144 = vadd.f32 %v64, %v143
    %145 = vmatmul.f32.gmra.mxu0 %v100
    %v146 = vpop.f32.mrf.mxu0
    %v147 = vadd.f32 %v69, %v146
    %148 = vmatmul.f32.gmra.mxu0 %v103
    %v149 = vpop.f32.mrf.mxu0
    %v150 = vadd.f32 %v74, %v149
    %151 = vmatmul.f32.gmra.mxu0 %v106
    %v152 = vpop.f32.mrf.mxu0
    %v153 = vadd.f32 %v79, %v152
    %154 = vmatmul.f32.gmra.mxu0 %v109
    %v155 = vpop.f32.mrf.mxu0
    %v156 = vadd.f32 %v84, %v155
    %157 = vdwg.mxu0
    %v158 = vmax.f32 %v135, 0.0
    %v159 = vmax.f32 %v138, 0.0
    %v160 = vmax.f32 %v141, 0.0
    %v161 = vmax.f32 %v144, 0.0
    %v162 = vmax.f32 %v147, 0.0
    %v163 = vmax.f32 %v150, 0.0
    %v164 = vmax.f32 %v153, 0.0
    %v165 = vmax.f32 %v156, 0.0
    %v166 = vld [vmem:[%s3] sm:$0xff]
    %v167 = vld [vmem:[%s3 + $0x8] sm:$0xff]
    %v168 = vld [vmem:[%s3 + $0x10] sm:$0xff]
    %v169 = vld [vmem:[%s3 + $0x18] sm:$0xff]
    %v170 = vld [vmem:[%s3 + $0x20] sm:$0xff]
    %v171 = vld [vmem:[%s3 + $0x28] sm:$0xff]
    %v172 = vld [vmem:[%s3 + $0x30] sm:$0xff]
    %v173 = vld [vmem:[%s3 + $0x38] sm:$0xff]
    %v174 = vld [vmem:[%s4] sm:$0xff]
    %v175 = vld [vmem:[%s4 + $0x8] sm:$0xff]
    %v176 = vld [vmem:[%s4 + $0x10] sm:$0xff]
    %v177 = vld [vmem:[%s4 + $0x18] sm:$0xff]
    %v178 = vld [vmem:[%s4 + $0x20] sm:$0xff]
    %v179 = vld [vmem:[%s4 + $0x28] sm:$0xff]
    %v180 = vld [vmem:[%s4 + $0x30] sm:$0xff]
    %v181 = vld [vmem:[%s4 + $0x38] sm:$0xff]
    %183 = vset.pattern.permute.xlu0 0
    %184 = vperm.xlu0 %183, %v174
    %v185 = vpop.permute.xlu0 %184
    %188 = vset.pattern.permute.xlu0 0
    %189 = vperm.xlu0 %188, %v175
    %v190 = vpop.permute.xlu0 %189
    %193 = vset.pattern.permute.xlu0 0
    %194 = vperm.xlu0 %193, %v176
    %v195 = vpop.permute.xlu0 %194
    %198 = vset.pattern.permute.xlu0 0
    %199 = vperm.xlu0 %198, %v177
    %v200 = vpop.permute.xlu0 %199
    %203 = vset.pattern.permute.xlu0 0
    %204 = vperm.xlu0 %203, %v178
    %v205 = vpop.permute.xlu0 %204
    %208 = vset.pattern.permute.xlu0 0
    %209 = vperm.xlu0 %208, %v179
    %v210 = vpop.permute.xlu0 %209
    %213 = vset.pattern.permute.xlu0 0
    %214 = vperm.xlu0 %213, %v180
    %v215 = vpop.permute.xlu0 %214
    %218 = vset.pattern.permute.xlu0 0
    %219 = vperm.xlu0 %218, %v181
    %v220 = vpop.permute.xlu0 %219
    %vm222 = vcmask 523264
    %v224 = vsel %vm222, %v166, 0
    %v227 = vsel %vm222, %v167, 0
    %v230 = vsel %vm222, %v168, 0
    %v233 = vsel %vm222, %v169, 0
    %v236 = vsel %vm222, %v170, 0
    %v239 = vsel %vm222, %v171, 0
    %v242 = vsel %vm222, %v172, 0
    %v245 = vsel %vm222, %v173, 0
    %247 = vmatpush.msra.mxu0 0.0
    %248 = vmatpush.msra.mxu0 0.0
    %249 = vmatpush.msra.mxu0 0.0
    %250 = vmatpush.msra.mxu0 0.0
    %251 = vmatpush.msra.mxu0 0.0
    %252 = vmatpush.msra.mxu0 0.0
    %253 = vmatpush.msra.mxu0 0.0
    %254 = vmatpush.msra.mxu0 0.0
    %255 = vmatpush.msra.mxu0 %v165
    %256 = vmatpush.msra.mxu0 %v164
    %257 = vmatpush.msra.mxu0 %v163
    %258 = vmatpush.msra.mxu0 %v162
    %259 = vmatpush.msra.mxu0 %v161
    %260 = vmatpush.msra.mxu0 %v160
    %261 = vmatpush.msra.mxu0 %v159
    %262 = vmatpush.msra.mxu0 %v158
    %263 = vmatmul.f32.gmra.mxu0 %v224
    %v264 = vpop.f32.mrf.mxu0
    %v265 = vadd.f32 %v185, %v264
    %266 = vmatmul.f32.gmra.mxu0 %v227
    %v267 = vpop.f32.mrf.mxu0
    %v268 = vadd.f32 %v190, %v267
    %269 = vmatmul.f32.gmra.mxu0 %v230
    %v270 = vpop.f32.mrf.mxu0
    %v271 = vadd.f32 %v195, %v270
    %272 = vmatmul.f32.gmra.mxu0 %v233
    %v273 = vpop.f32.mrf.mxu0
    %v274 = vadd.f32 %v200, %v273
    %275 = vmatmul.f32.gmra.mxu0 %v236
    %v276 = vpop.f32.mrf.mxu0
    %v277 = vadd.f32 %v205, %v276
    %278 = vmatmul.f32.gmra.mxu0 %v239
    %v279 = vpop.f32.mrf.mxu0
    %v280 = vadd.f32 %v210, %v279
    %281 = vmatmul.f32.gmra.mxu0 %v242
    %v282 = vpop.f32.mrf.mxu0
    %v283 = vadd.f32 %v215, %v282
    %284 = vmatmul.f32.gmra.mxu0 %v245
    %v285 = vpop.f32.mrf.mxu0
    %v286 = vadd.f32 %v220, %v285
    %287 = vdwg.mxu0
    %v288 = vmax.f32 %v265, 0.0
    %v289 = vmax.f32 %v268, 0.0
    %v290 = vmax.f32 %v271, 0.0
    %v291 = vmax.f32 %v274, 0.0
    %v292 = vmax.f32 %v277, 0.0
    %v293 = vmax.f32 %v280, 0.0
    %v294 = vmax.f32 %v283, 0.0
    %v295 = vmax.f32 %v286, 0.0
    %v296 = vld [vmem:[%s5] sm:$0xff]
    %v297 = vld [vmem:[%s5 + $0x8] sm:$0xff]
    %v298 = vld [vmem:[%s5 + $0x10] sm:$0xff]
    %v299 = vld [vmem:[%s5 + $0x18] sm:$0xff]
    %v300 = vld [vmem:[%s5 + $0x20] sm:$0xff]
    %v301 = vld [vmem:[%s5 + $0x28] sm:$0xff]
    %v302 = vld [vmem:[%s5 + $0x30] sm:$0xff]
    %v303 = vld [vmem:[%s5 + $0x38] sm:$0xff]
    %305 = vset.pattern.permute.xlu0 0
    %306 = vperm.xlu0 %305, %v296
    %v307 = vpop.permute.xlu0 %306
    %310 = vset.pattern.permute.xlu0 0
    %311 = vperm.xlu0 %310, %v297
    %v312 = vpop.permute.xlu0 %311
    %315 = vset.pattern.permute.xlu0 0
    %316 = vperm.xlu0 %315, %v298
    %v317 = vpop.permute.xlu0 %316
    %320 = vset.pattern.permute.xlu0 0
    %321 = vperm.xlu0 %320, %v299
    %v322 = vpop.permute.xlu0 %321
    %325 = vset.pattern.permute.xlu0 0
    %326 = vperm.xlu0 %325, %v300
    %v327 = vpop.permute.xlu0 %326
    %330 = vset.pattern.permute.xlu0 0
    %331 = vperm.xlu0 %330, %v301
    %v332 = vpop.permute.xlu0 %331
    %335 = vset.pattern.permute.xlu0 0
    %336 = vperm.xlu0 %335, %v302
    %v337 = vpop.permute.xlu0 %336
    %340 = vset.pattern.permute.xlu0 0
    %341 = vperm.xlu0 %340, %v303
    %v342 = vpop.permute.xlu0 %341
    %v344 = vmul.f32 %v288, %v307
    %v345 = vmul.f32 %v289, %v312
    %v346 = vmul.f32 %v290, %v317
    %v347 = vmul.f32 %v291, %v322
    %v348 = vmul.f32 %v292, %v327
    %v349 = vmul.f32 %v293, %v332
    %v350 = vmul.f32 %v294, %v337
    %v351 = vmul.f32 %v295, %v342
    %vm352 = vcmask 130048
    %v353 = vsel %vm352, %v344, 0.0
    %v354 = vsel %vm352, %v345, 0.0
    %v355 = vadd.f32 %v353, %v354
    %v356 = vsel %vm352, %v346, 0.0
    %v357 = vadd.f32 %v355, %v356
    %v358 = vsel %vm352, %v347, 0.0
    %v359 = vadd.f32 %v357, %v358
    %v360 = vsel %vm352, %v348, 0.0
    %v361 = vadd.f32 %v359, %v360
    %v362 = vsel %vm352, %v349, 0.0
    %v363 = vadd.f32 %v361, %v362
    %v364 = vsel %vm352, %v350, 0.0
    %v365 = vadd.f32 %v363, %v364
    %v366 = vsel %vm352, %v351, 0.0
    %v367 = vadd.f32 %v365, %v366
    %v368 = vrot.slane %v367, 4
    %v369 = vadd.f32 %v367, %v368
    %v370 = vrot.slane %v369, 2
    %v371 = vadd.f32 %v369, %v370
    %v372 = vrot.slane %v371, 1
    %v373 = vadd.f32 %v371, %v372
    %s374 = sld [smem:[#allocation2]]
    %v375 = vstv %s374
    %v376 = vadd.f32 %v373, %v375
    %vm377 = vcmask 122880
    %378 = vst.msk [vmem:[#allocation3] sm:$0x1] %vm377, %v376
    // Predicated region
    $region30: #{tpu_custom_call.1} parent=1 // pred_check
      _
    $region31: #{tpu_custom_call.1} parent=1 // pred_check_branch
      %380 = sbr.rel (0) target = $region33
    $region32: #{tpu_custom_call.1} parent=1 // pred_region
      %382 = vsyncadd [#allocation4], 0
      %s384 = sshll.u32 [#allocation3], 4
      %s385 = int_to_ptr.vmem [resolvable:$true] %s384
      %s386 = sshll.u32 %s7, 4
      %s387 = int_to_ptr.hbm [resolvable:$true] %s386
      %389 = dma.vmem_to_hbm [thread:$0]  %s385, 16, %s387, [#allocation4]
    $region33: #{tpu_custom_call.1} parent=1 // pred_fallthru
      _
    // Predicated region
    $region34: #{tpu_custom_call.1} parent=1 // pred_check
      _
    $region35: #{tpu_custom_call.1} parent=1 // pred_check_branch
      %391 = sbr.rel (0) target = $region37
    $region36: #{tpu_custom_call.1} parent=1 // pred_region
      %393 = dma.done [#allocation4], 16
    $region37: #{tpu_custom_call.1} parent=1 // pred_fallthru
      _
    %394 = vsyncpa [#allocation4], 1

</llo_original>
